<compile_context>
chip_gen: v7x
topology: tpu7x:2x2x1
jax: 0.10.0
libtpu: 0.0.40
codegen_flags: <defaults>
</compile_context>

<pallas_src>
import functools
import math

import jax
import jax.numpy as jnp
import numpy as np
from jax.experimental import pallas as pl
from jax.experimental.pallas import tpu as pltpu


def _round_up(x, m):
    return (x + m - 1) // m * m


def _vmem_limit_bytes():
    """Generation-aware scoped-VMEM budget: ~70% of physical, capped at 96 MiB."""
    try:
        cap = getattr(pltpu.get_tpu_info(), "vmem_capacity_bytes", 0) or 0
        if cap:
            return int(min(cap * 0.7, 96 * 1024 * 1024))
    except Exception:
        pass
    return 48 * 1024 * 1024


_VMEM_LIMIT = _vmem_limit_bytes()


def _cparams(*semantics):
    return pltpu.CompilerParams(dimension_semantics=semantics,
                                vmem_limit_bytes=_VMEM_LIMIT)


def _pick_cout(c, cap=512, tile=512):
    """Output-channel tile: full dim when small / non-tileable, else lane-dense tile."""
    if c <= cap or c % tile != 0:
        return c
    return tile


# ----------------------------------------------------------------------------
# Pallas tiled matmul (bf16 MXU inputs, fp32 accumulate, fused residual / bias)
# Used for the root im2col conv and the classification head.
# ----------------------------------------------------------------------------
def _mm_kernel(a_ref, b_ref, o_ref):
    o_ref[...] = jnp.dot(a_ref[...], b_ref[...],
                         preferred_element_type=jnp.float32).astype(o_ref.dtype)


def _mm_res_kernel(a_ref, b_ref, r_ref, o_ref):
    acc = jnp.dot(a_ref[...], b_ref[...], preferred_element_type=jnp.float32)
    o_ref[...] = (acc + r_ref[...].astype(jnp.float32)).astype(o_ref.dtype)


def _mm_multi_kernel(a_ref, b_ref, o_ref, acc_ref):
    @pl.when(pl.program_id(2) == 0)
    def _():
        acc_ref[...] = jnp.zeros_like(acc_ref)

    acc_ref[...] += jnp.dot(a_ref[...], b_ref[...],
                            preferred_element_type=jnp.float32)

    @pl.when(pl.program_id(2) == pl.num_programs(2) - 1)
    def _():
        o_ref[...] = acc_ref[...].astype(o_ref.dtype)


def _mm_multi_res_kernel(a_ref, b_ref, r_ref, o_ref, acc_ref):
    @pl.when(pl.program_id(2) == 0)
    def _():
        acc_ref[...] = jnp.zeros_like(acc_ref)

    acc_ref[...] += jnp.dot(a_ref[...], b_ref[...],
                            preferred_element_type=jnp.float32)

    @pl.when(pl.program_id(2) == pl.num_programs(2) - 1)
    def _():
        o_ref[...] = (acc_ref[...] + r_ref[...].astype(jnp.float32)
                      ).astype(o_ref.dtype)


_M_CAP, _N_CAP, _K_CAP = 512, 512, 2048
_M_TILE, _N_TILE, _K_TILE = 256, 512, 512


def _pick(dim, cap, tile):
    if dim <= cap:
        return dim, dim
    return tile, _round_up(dim, tile)


def pallas_matmul(a, b, residual=None, out_dtype=jnp.float32):
    """C = A @ B (+ residual). A/B feed the MXU in bf16; accumulation in f32."""
    M, K = a.shape
    K2, N = b.shape
    assert K == K2
    a = a.astype(jnp.bfloat16)
    b = b.astype(jnp.bfloat16)
    tm, Mp = _pick(M, _M_CAP, _M_TILE)
    tn, Np = _pick(N, _N_CAP, _N_TILE)
    tk, Kp = _pick(K, _K_CAP, _K_TILE)
    if (Mp, Kp) != (M, K):
        a = jnp.pad(a, ((0, Mp - M), (0, Kp - K)))
    if (Kp, Np) != (K, N):
        b = jnp.pad(b, ((0, Kp - K), (0, Np - N)))
    args = [a, b]
    nk = Kp // tk

    if nk == 1:
        grid = (Mp // tm, Np // tn)
        in_specs = [pl.BlockSpec((tm, tk), lambda i, j: (i, 0)),
                    pl.BlockSpec((tk, tn), lambda i, j: (0, j))]
        out_spec = pl.BlockSpec((tm, tn), lambda i, j: (i, j))
        scratch = []
        semantics = ("parallel", "parallel")
        kernel = _mm_kernel
        if residual is not None:
            r = residual
            if (Mp, Np) != (M, N):
                r = jnp.pad(r, ((0, Mp - M), (0, Np - N)))
            in_specs.append(pl.BlockSpec((tm, tn), lambda i, j: (i, j)))
            args.append(r)
            kernel = _mm_res_kernel
    else:
        grid = (Mp // tm, Np // tn, nk)
        in_specs = [pl.BlockSpec((tm, tk), lambda i, j, k: (i, k)),
                    pl.BlockSpec((tk, tn), lambda i, j, k: (k, j))]
        out_spec = pl.BlockSpec((tm, tn), lambda i, j, k: (i, j))
        scratch = [pltpu.VMEM((tm, tn), jnp.float32)]
        semantics = ("parallel", "parallel", "arbitrary")
        kernel = _mm_multi_kernel
        if residual is not None:
            r = residual
            if (Mp, Np) != (M, N):
                r = jnp.pad(r, ((0, Mp - M), (0, Np - N)))
            in_specs.append(pl.BlockSpec((tm, tn), lambda i, j, k: (i, j)))
            args.append(r)
            kernel = _mm_multi_res_kernel

    out = pl.pallas_call(
        kernel,
        out_shape=jax.ShapeDtypeStruct((Mp, Np), out_dtype),
        grid=grid,
        in_specs=in_specs,
        out_specs=out_spec,
        scratch_shapes=scratch,
        compiler_params=_cparams(*semantics),
    )(*args)
    if (Mp, Np) != (M, N):
        out = out[:M, :N]
    return out


# ----------------------------------------------------------------------------
# Weight standardization (StdConv2d) - run ONCE per model in prepare_params
# ----------------------------------------------------------------------------
def _ws_kernel(w_ref, o_ref):
    w = w_ref[...]                                     # (to, fan_in)
    m = jnp.mean(w, axis=1, keepdims=True)
    d = w - m
    v = jnp.mean(d * d, axis=1, keepdims=True)         # biased variance
    o_ref[...] = d * jax.lax.rsqrt(v + 1e-10)


def standardize_weight(w_oihw):
    O = w_oihw.shape[0]
    K = int(math.prod(w_oihw.shape[1:]))
    w2 = w_oihw.reshape(O, K).astype(jnp.float32)
    to = 64 if O % 64 == 0 else (8 if O % 8 == 0 else O)
    out = pl.pallas_call(
        _ws_kernel,
        out_shape=jax.ShapeDtypeStruct((O, K), jnp.float32),
        grid=(O // to,),
        in_specs=[pl.BlockSpec((to, K), lambda i: (i, 0))],
        out_specs=pl.BlockSpec((to, K), lambda i: (i, 0)),
        compiler_params=_cparams("parallel"),
    )(w2)
    return out.reshape(w_oihw.shape)


# ----------------------------------------------------------------------------
# GroupNorm(32) statistics -> per-(sample, channel) scale/shift (the affine +
# ReLU itself is fused into the consuming conv kernels' LHS prologue)
# ----------------------------------------------------------------------------
def _gn_stats_kernel(x_ref, o_ref):
    x = x_ref[0].astype(jnp.float32)                   # (HW, C)
    s1 = jnp.sum(x, axis=0, keepdims=True)
    s2 = jnp.sum(x * x, axis=0, keepdims=True)
    o_ref[0] = jnp.concatenate([s1, s2], axis=0)       # (2, C)


def gn_scale_shift(x_flat, gamma, beta, groups=32, eps=1e-5):
    """x_flat: (N, HW, C) bf16.  Returns f32 scale/shift of shape (N, C) with
    scale = rstd * gamma and shift = beta - mean * rstd * gamma."""
    N, HW, C = x_flat.shape
    sums = pl.pallas_call(
        _gn_stats_kernel,
        out_shape=jax.ShapeDtypeStruct((N, 2, C), jnp.float32),
        grid=(N,),
        in_specs=[pl.BlockSpec((1, HW, C), lambda n: (n, 0, 0))],
        out_specs=pl.BlockSpec((1, 2, C), lambda n: (n, 0, 0)),
        compiler_params=_cparams("parallel"),
    )(x_flat)
    Cg = C // groups
    grp = sums.reshape(N, 2, groups, Cg).sum(-1)        # tiny (N, 2, G)
    cnt = float(HW * Cg)
    mean = grp[:, 0] / cnt
    var = jnp.maximum(grp[:, 1] / cnt - mean * mean, 0.0)
    rstd = jax.lax.rsqrt(var + eps)
    mean_c = jnp.repeat(mean, Cg, axis=1)               # (N, C)
    rstd_c = jnp.repeat(rstd, Cg, axis=1)
    scale = rstd_c * gamma[None, :].astype(jnp.float32)
    shift = beta[None, :].astype(jnp.float32) - mean_c * scale
    return scale, shift


# ----------------------------------------------------------------------------
# Fused GroupNorm+ReLU -> 1x1 StdConv (optionally strided / with residual add)
# ----------------------------------------------------------------------------
def _mm_gn_kernel(x_ref, sc_ref, sh_ref, w_ref, o_ref):
    x = x_ref[0].astype(jnp.float32)                    # (HW, Cin)
    y = jnp.maximum(x * sc_ref[...] + sh_ref[...], 0.0).astype(jnp.bfloat16)
    o_ref[0] = jnp.dot(y, w_ref[...],
                       preferred_element_type=jnp.float32).astype(o_ref.dtype)


def _mm_gn_res_kernel(x_ref, sc_ref, sh_ref, w_ref, r_ref, o_ref):
    x = x_ref[0].astype(jnp.float32)
    y = jnp.maximum(x * sc_ref[...] + sh_ref[...], 0.0).astype(jnp.bfloat16)
    acc = jnp.dot(y, w_ref[...], preferred_element_type=jnp.float32)
    o_ref[0] = (acc + r_ref[0].astype(jnp.float32)).astype(o_ref.dtype)


def _mm_gn_stride_kernel(x_ref, sc_ref, sh_ref, w_ref, o_ref, *, cin):
    # x_ref: (1, Ho, 1, Wo, stride*Cin) -- row parity 0 of a free reshaped view;
    # the first `cin` lanes are column parity 0 -> the ::stride, ::stride subset.
    xb = x_ref[0]
    ho, _, wo, _ = xb.shape
    x2 = xb[:, 0, :, :cin].reshape(ho * wo, cin).astype(jnp.float32)
    y = jnp.maximum(x2 * sc_ref[...] + sh_ref[...], 0.0).astype(jnp.bfloat16)
    o_ref[0] = jnp.dot(y, w_ref[...],
                       preferred_element_type=jnp.float32).astype(o_ref.dtype)


def conv1x1_gn(x_nhwc, scale, shift, w_mat, stride=1, residual=None):
    """relu(gn(x)) -> 1x1 StdConv, fully fused.  Returns (N, Ho*Wo, Cout) bf16."""
    N, H, W, Cin = x_nhwc.shape
    Cout = w_mat.shape[1]
    tn = _pick_cout(Cout)
    grid = (N, Cout // tn)
    if stride == 1:
        HW = H * W
        xf = x_nhwc.reshape(N, HW, Cin)
        in_specs = [pl.BlockSpec((1, HW, Cin), lambda n, j: (n, 0, 0)),
                    pl.BlockSpec((1, Cin), lambda n, j: (n, 0)),
                    pl.BlockSpec((1, Cin), lambda n, j: (n, 0)),
                    pl.BlockSpec((Cin, tn), lambda n, j: (0, j))]
        args = [xf, scale, shift, w_mat]
        kernel = _mm_gn_kernel
        if residual is not None:
            in_specs.append(pl.BlockSpec((1, HW, tn), lambda n, j: (n, 0, j)))
            args.append(residual)
            kernel = _mm_gn_res_kernel
        out_shape = jax.ShapeDtypeStruct((N, HW, Cout), jnp.bfloat16)
        out_spec = pl.BlockSpec((1, HW, tn), lambda n, j: (n, 0, j))
    else:
        assert residual is None and H % stride == 0 and W % stride == 0
        Ho, Wo = H // stride, W // stride
        xv = x_nhwc.reshape(N, Ho, stride, Wo, stride * Cin)   # free view
        in_specs = [pl.BlockSpec((1, Ho, 1, Wo, stride * Cin),
                                 lambda n, j: (n, 0, 0, 0, 0)),
                    pl.BlockSpec((1, Cin), lambda n, j: (n, 0)),
                    pl.BlockSpec((1, Cin), lambda n, j: (n, 0)),
                    pl.BlockSpec((Cin, tn), lambda n, j: (0, j))]
        args = [xv, scale, shift, w_mat]
        kernel = functools.partial(_mm_gn_stride_kernel, cin=Cin)
        out_shape = jax.ShapeDtypeStruct((N, Ho * Wo, Cout), jnp.bfloat16)
        out_spec = pl.BlockSpec((1, Ho * Wo, tn), lambda n, j: (n, 0, j))
    return pl.pallas_call(
        kernel, out_shape=out_shape, grid=grid, in_specs=in_specs,
        out_specs=out_spec,
        compiler_params=_cparams("parallel", "parallel"),
    )(*args)


# ----------------------------------------------------------------------------
# Shifted-slab spatial 3x3 conv with fused GroupNorm+ReLU, and 3x3/2 max-pool
# ----------------------------------------------------------------------------
def _spatial_prep(x_nhwc, kh, kw, stride, pad):
    """Pad + parity-flatten; the flattened row stride Ws is sublane aligned."""
    N, H, W, C = x_nhwc.shape
    Hp, Wp = H + 2 * pad, W + 2 * pad
    Ho = (Hp - kh) // stride + 1
    Wo = (Wp - kw) // stride + 1
    Wh = -(-Wp // stride)
    Ws = _round_up(Wh, 8)
    max_off = ((kh - 1) // stride) * Ws + (kw - 1) // stride
    Hs = max(-(-(max_off + Ho * Ws) // Ws), -(-Hp // stride))
    xp = jnp.pad(x_nhwc,
                 ((0, 0), (pad, Hs * stride - pad - H),
                  (pad, Ws * stride - pad - W), (0, 0)))
    if stride == 1:
        x_r = xp.reshape(N, 1, Hs * Ws, C)
    else:
        x_r = xp.reshape(N, Hs, stride, Ws, stride, C)
        x_r = x_r.transpose(0, 2, 4, 1, 3, 5).reshape(
            N, stride * stride, Hs * Ws, C)
    taps = tuple(((dh % stride) * stride + (dw % stride),
                  (dh // stride) * Ws + (dw // stride))
                 for dh in range(kh) for dw in range(kw))
    return x_r, Ho, Wo, Hs, Ws, taps


def _valid_mask(H, W, pad, stride, Hs, Ws):
    """{0,1} mask over the parity-flattened slab: 1 on the original HxW interior."""
    q = np.arange(Hs * Ws)
    rows = (q // Ws) * stride
    cols = (q % Ws) * stride
    m = np.zeros((stride * stride, Hs * Ws, 1), np.float32)
    for rh in range(stride):
        for rw in range(stride):
            ok = ((rows + rh >= pad) & (rows + rh < pad + H)
                  & (cols + rw >= pad) & (cols + rw < pad + W))
            m[rh * stride + rw, :, 0] = ok
    return jnp.asarray(m)


def _conv3x3_gn_kernel(x_ref, m_ref, sc_ref, sh_ref, w_ref, o_ref, act_ref,
                       *, taps, ho, ws, wo):
    ss = act_ref.shape[0]
    sc = sc_ref[...]
    sh = sh_ref[...]
    # Prologue: GroupNorm affine + ReLU on the raw slab; the mask re-zeroes all
    # padded positions so the fused conv sees exactly PyTorch's zero padding.
    for p in range(ss):
        xp = x_ref[0, p].astype(jnp.float32)
        act_ref[p] = (jnp.maximum(xp * sc + sh, 0.0) * m_ref[p]
                      ).astype(jnp.bfloat16)
    macc = ho * ws
    acc = None
    # Single chained accumulation (lets Mosaic keep it in registers / the v7x
    # MXU result buffer where possible).
    for t, (p, off) in enumerate(taps):
        a = act_ref[p, off:off + macc, :]
        c = jnp.dot(a, w_ref[t], preferred_element_type=jnp.float32)
        acc = c if acc is None else acc + c
    # In-VMEM crop of the Ws-strided rows into a dense (Ho, Wo, tn) output
    # block: no XLA pad/reshape/slice passes on the conv output.
    acc = acc.reshape(ho, ws, acc.shape[1])[:, :wo, :]
    o_ref[0] = acc.astype(o_ref.dtype)


def conv3x3_gn(x_nhwc, scale, shift, w_taps, stride):
    """relu(gn(x)) -> 3x3 StdConv (pad 1, given stride), fully fused.
    w_taps: (9, Cin, Cout) pre-standardized bf16.  Returns (N, Ho, Wo, Cout)."""
    N, H, W, C = x_nhwc.shape
    T, Cin, Cout = w_taps.shape
    assert Cin == C and T == 9
    x_r, Ho, Wo, Hs, Ws, taps = _spatial_prep(x_nhwc, 3, 3, stride, 1)
    mask = _valid_mask(H, W, 1, stride, Hs, Ws)
    ss = stride * stride
    HWs = Hs * Ws
    tn = _pick_cout(Cout)
    return pl.pallas_call(
        functools.partial(_conv3x3_gn_kernel, taps=taps, ho=Ho, ws=Ws, wo=Wo),
        out_shape=jax.ShapeDtypeStruct((N, Ho, Wo, Cout), jnp.bfloat16),
        grid=(N, Cout // tn),
        in_specs=[pl.BlockSpec((1, ss, HWs, C), lambda n, j: (n, 0, 0, 0)),
                  pl.BlockSpec((ss, HWs, 1), lambda n, j: (0, 0, 0)),
                  pl.BlockSpec((1, C), lambda n, j: (n, 0)),
                  pl.BlockSpec((1, C), lambda n, j: (n, 0)),
                  pl.BlockSpec((T, C, tn), lambda n, j: (0, 0, j))],
        out_specs=pl.BlockSpec((1, Ho, Wo, tn), lambda n, j: (n, 0, 0, j)),
        scratch_shapes=[pltpu.VMEM((ss, HWs, C), jnp.bfloat16)],
        compiler_params=_cparams("parallel", "parallel"),
    )(x_r, mask, scale, shift, w_taps)


def _maxpool_kernel(x_ref, o_ref, *, taps, ho, ws, wo):
    m = None
    for p, off in taps:
        v = x_ref[0, p, off:off + ho * ws, :]
        m = v if m is None else jnp.maximum(m, v)
    m = m.reshape(ho, ws, m.shape[1])[:, :wo, :]
    o_ref[0] = m.astype(o_ref.dtype)


def max_pool_3x3_s2_pad1(x_nhwc):
    """ConstantPad2d(1, 0) + MaxPool2d(kernel=3, stride=2); bf16 in/out."""
    N, H, W, C = x_nhwc.shape
    x_r, Ho, Wo, Hs, Ws, taps = _spatial_prep(x_nhwc, 3, 3, 2, 1)
    HWs = Hs * Ws
    return pl.pallas_call(
        functools.partial(_maxpool_kernel, taps=taps, ho=Ho, ws=Ws, wo=Wo),
        out_shape=jax.ShapeDtypeStruct((N, Ho, Wo, C), x_nhwc.dtype),
        grid=(N,),
        in_specs=[pl.BlockSpec((1, 4, HWs, C), lambda n: (n, 0, 0, 0))],
        out_specs=pl.BlockSpec((1, Ho, Wo, C), lambda n: (n, 0, 0, 0)),
        compiler_params=_cparams("parallel"),
    )(x_r)


# ----------------------------------------------------------------------------
# Head: fused GroupNorm+ReLU global average pool
# ----------------------------------------------------------------------------
def _gn_avg_kernel(x_ref, sc_ref, sh_ref, o_ref):
    x = x_ref[0].astype(jnp.float32)                    # (HW, C)
    y = jnp.maximum(x * sc_ref[...] + sh_ref[...], 0.0)
    o_ref[...] = jnp.mean(y, axis=0, keepdims=True)


def gn_relu_avg_pool(x_nhwc, scale, shift):
    N, H, W, C = x_nhwc.shape
    HW = H * W
    xf = x_nhwc.reshape(N, HW, C)
    return pl.pallas_call(
        _gn_avg_kernel,
        out_shape=jax.ShapeDtypeStruct((N, C), jnp.float32),
        grid=(N,),
        in_specs=[pl.BlockSpec((1, HW, C), lambda n: (n, 0, 0)),
                  pl.BlockSpec((1, C), lambda n: (n, 0)),
                  pl.BlockSpec((1, C), lambda n: (n, 0))],
        out_specs=pl.BlockSpec((1, C), lambda n: (n, 0)),
        compiler_params=_cparams("parallel"),
    )(xf, scale, shift)


# ----------------------------------------------------------------------------
# Root 7x7/2 StdConv: small XLA im2col (K = 147) + one MXU matmul
# ----------------------------------------------------------------------------
def root_conv7x7(x_nhwc, w_mat):
    N, H, W, C = x_nhwc.shape
    k, s, p = 7, 2, 3
    Ho = (H + 2 * p - k) // s + 1
    Wo = (W + 2 * p - k) // s + 1
    xp = jnp.pad(x_nhwc, ((0, 0), (p, p), (p, p), (0, 0)))
    cols = [xp[:, dh:dh + (Ho - 1) * s + 1:s, dw:dw + (Wo - 1) * s + 1:s, :]
            for dh in range(k) for dw in range(k)]
    patches = jnp.concatenate(cols, axis=-1).astype(jnp.bfloat16)
    a = patches.reshape(N * Ho * Wo, k * k * C)
    out = pallas_matmul(a, w_mat, out_dtype=jnp.bfloat16)
    return out.reshape(N, Ho, Wo, -1)


# ----------------------------------------------------------------------------
# One-time parameter preparation (weight standardization + packing + casts)
# ----------------------------------------------------------------------------
def _prep_3x3(w_oihw):
    O, I, KH, KW = w_oihw.shape
    w = standardize_weight(w_oihw)
    w = jnp.transpose(w, (2, 3, 1, 0)).reshape(KH * KW, I, O)
    return w.astype(jnp.bfloat16)


def _prep_1x1(w_oihw):
    O, I, KH, KW = w_oihw.shape
    assert KH == 1 and KW == 1
    w = standardize_weight(w_oihw)
    return w.reshape(O, I).T.astype(jnp.bfloat16)


def _prep_root(w_oihw):
    O, I, KH, KW = w_oihw.shape
    w = standardize_weight(w_oihw)
    return jnp.transpose(w, (2, 3, 1, 0)).reshape(KH * KW * I, O).astype(jnp.bfloat16)


def prepare_params(params):
    prepped = {'root_conv': _prep_root(params['root_conv'])}
    body = []
    for block in params['body']:
        units = []
        for u in block:
            q = {'gn1_g': u['gn1_g'], 'gn1_b': u['gn1_b'],
                 'gn2_g': u['gn2_g'], 'gn2_b': u['gn2_b'],
                 'gn3_g': u['gn3_g'], 'gn3_b': u['gn3_b'],
                 'conv1': _prep_1x1(u['conv1']),
                 'conv2': _prep_3x3(u['conv2']),
                 'conv3': _prep_1x1(u['conv3'])}
            if 'downsample' in u:
                q['downsample'] = _prep_1x1(u['downsample'])
            units.append(q)
        body.append(units)
    prepped['body'] = body
    prepped['head_gn_g'] = params['head_gn_g']
    prepped['head_gn_b'] = params['head_gn_b']
    prepped['head_w'] = params['head_conv_w'][:, :, 0, 0].T.astype(jnp.bfloat16)
    prepped['head_b'] = params['head_conv_b'].astype(jnp.float32)
    return prepped


# ----------------------------------------------------------------------------
# PreActBottleneck + full ResNetV2 forward
# ----------------------------------------------------------------------------
def preact_bottleneck(x_nhwc, p, stride):
    N, H, W, Cin = x_nhwc.shape
    x_flat = x_nhwc.reshape(N, H * W, Cin)

    sc1, sh1 = gn_scale_shift(x_flat, p['gn1_g'], p['gn1_b'])
    if 'downsample' in p:
        residual = conv1x1_gn(x_nhwc, sc1, sh1, p['downsample'], stride=stride)
    else:
        residual = x_flat                                   # stride == 1 here

    y = conv1x1_gn(x_nhwc, sc1, sh1, p['conv1'])            # (N, H*W, Cmid)
    Cmid = p['conv1'].shape[1]

    sc2, sh2 = gn_scale_shift(y, p['gn2_g'], p['gn2_b'])
    y = conv3x3_gn(y.reshape(N, H, W, Cmid), sc2, sh2, p['conv2'], stride)
    _, Ho, Wo, _ = y.shape

    sc3, sh3 = gn_scale_shift(y.reshape(N, Ho * Wo, Cmid),
                              p['gn3_g'], p['gn3_b'])
    out = conv1x1_gn(y, sc3, sh3, p['conv3'], residual=residual)  # fused add
    Cout = p['conv3'].shape[1]
    return out.reshape(N, Ho, Wo, Cout)


def resnetv2_forward(x_nchw, prepped):
    x = jnp.transpose(x_nchw, (0, 2, 3, 1)).astype(jnp.float32)   # NCHW -> NHWC
    x = root_conv7x7(x, prepped['root_conv'])                     # bf16
    x = max_pool_3x3_s2_pad1(x)
    for bi, block in enumerate(prepped['body']):
        for ui, unit in enumerate(block):
            stride = 2 if (bi > 0 and ui == 0) else 1
            x = preact_bottleneck(x, unit, stride)
    N, H, W, C = x.shape
    sc, sh = gn_scale_shift(x.reshape(N, H * W, C),
                            prepped['head_gn_g'], prepped['head_gn_b'])
    avg = gn_relu_avg_pool(x, sc, sh)                             # (N, C) f32
    n_cls = prepped['head_b'].shape[0]
    bias = jnp.broadcast_to(prepped['head_b'][None, :], (N, n_cls))
    return pallas_matmul(avg, prepped['head_w'], residual=bias)   # (N, nc) f32


# ----------------------------------------------------------------------------
# Deterministic parameter construction (shapes from ResNetV2.__init__)
# ----------------------------------------------------------------------------
def _gn_init(key, c):
    k1, k2 = jax.random.split(key)
    g = 1.0 + 0.05 * jax.random.normal(k1, (c,), jnp.float32)
    b = 0.05 * jax.random.normal(k2, (c,), jnp.float32)
    return g, b


def _conv_init(key, o, i, k):
    return 0.05 * jax.random.normal(key, (o, i, k, k), jnp.float32)


def _init_unit(key, cin, cout, cmid, stride):
    ks = jax.random.split(key, 7)
    p = {}
    p['gn1_g'], p['gn1_b'] = _gn_init(ks[0], cin)
    p['conv1'] = _conv_init(ks[1], cmid, cin, 1)
    p['gn2_g'], p['gn2_b'] = _gn_init(ks[2], cmid)
    p['conv2'] = _conv_init(ks[3], cmid, cmid, 3)
    p['gn3_g'], p['gn3_b'] = _gn_init(ks[4], cmid)
    p['conv3'] = _conv_init(ks[5], cout, cmid, 1)
    if stride != 1 or cin != cout:
        p['downsample'] = _conv_init(ks[6], cout, cin, 1)
    return p


def init_resnet_params(key, block_units=(1, 1, 1, 1), wf=1, head_size=10):
    keys = list(jax.random.split(key, 64))
    it = iter(keys)
    params = {'root_conv': _conv_init(next(it), 64 * wf, 3, 7)}
    specs = [(64 * wf, 256 * wf, 64 * wf, 1, block_units[0]),
             (256 * wf, 512 * wf, 128 * wf, 2, block_units[1]),
             (512 * wf, 1024 * wf, 256 * wf, 2, block_units[2]),
             (1024 * wf, 2048 * wf, 512 * wf, 2, block_units[3])]
    body = []
    for cin0, cout, cmid, stride0, n_units in specs:
        block = []
        for u in range(n_units):
            cin = cin0 if u == 0 else cout
            stride = stride0 if u == 0 else 1
            block.append(_init_unit(next(it), cin, cout, cmid, stride))
        body.append(block)
    params['body'] = body
    params['head_gn_g'], params['head_gn_b'] = _gn_init(next(it), 2048 * wf)
    params['head_conv_w'] = 0.05 * jax.random.normal(
        next(it), (head_size, 2048 * wf, 1, 1), jnp.float32)
    params['head_conv_b'] = 0.05 * jax.random.normal(
        next(it), (head_size,), jnp.float32)
    return params


if __name__ == "__main__":
    key = jax.random.PRNGKey(0)
    pkey, xkey = jax.random.split(key)
    # ResNetV2(block_units=[1,1,1,1], width_factor=1, head_size=10, bam=False)
    raw_params = init_resnet_params(pkey, block_units=(1, 1, 1, 1), wf=1,
                                    head_size=10)
    prepped = prepare_params(raw_params)          # one-time weight prep
    forward = jax.jit(resnetv2_forward)

    x = jax.random.normal(xkey, (2, 3, 32, 32), jnp.float32)   # NCHW like torch
    logits = jax.block_until_ready(forward(x, prepped))
    assert logits.shape == (2, 10), logits.shape
    assert bool(jnp.all(jnp.isfinite(logits)))
    print("KERNEL_OK")
</pallas_src>

<mosaic_0001>
module attributes {stable_mosaic.version = 11 : i64} {
  func.func @_ws_kernel(%arg0: i32, %arg1: memref<64x147xf32, #tpu.memory_space<vmem>>, %arg2: memref<64x147xf32, #tpu.memory_space<vmem>>) attributes {dimension_semantics = [#tpu.dimension_semantics<parallel>], iteration_bounds = array<i64: 1>, scalar_prefetch = 0 : i64, scratch_operands = 0 : i64, tpu.core_type = #tpu.core_type<tc>, window_params = [{transform_indices = @transform_0, window_bounds = array<i64: 64, 147>}, {transform_indices = @transform_1, window_bounds = array<i64: 64, 147>}]} {
    %c0 = arith.constant 0 : index
    %c0_0 = arith.constant 0 : index
    %0 = vector.load %arg1[%c0, %c0_0] : memref<64x147xf32, #tpu.memory_space<vmem>>, vector<64x147xf32>
    %cst = arith.constant dense<0.000000e+00> : vector<64xf32>
    %1 = vector.multi_reduction <add>, %0, %cst [1] : vector<64x147xf32> to vector<64xf32>
    %2 = vector.shape_cast %1 : vector<64xf32> to vector<64x1xf32>
    %cst_1 = arith.constant 1.470000e+02 : f32
    %3 = vector.broadcast %cst_1 : f32 to vector<64x1xf32>
    %4 = arith.divf %2, %3 : vector<64x1xf32>
    %5 = vector.broadcast %4 : vector<64x1xf32> to vector<64x147xf32>
    %6 = arith.subf %0, %5 : vector<64x147xf32>
    %7 = arith.mulf %6, %6 : vector<64x147xf32>
    %cst_2 = arith.constant dense<0.000000e+00> : vector<64xf32>
    %8 = vector.multi_reduction <add>, %7, %cst_2 [1] : vector<64x147xf32> to vector<64xf32>
    %9 = vector.shape_cast %8 : vector<64xf32> to vector<64x1xf32>
    %cst_3 = arith.constant 1.470000e+02 : f32
    %10 = vector.broadcast %cst_3 : f32 to vector<64x1xf32>
    %11 = arith.divf %9, %10 : vector<64x1xf32>
    %cst_4 = arith.constant 1.000000e-10 : f32
    %12 = vector.broadcast %cst_4 : f32 to vector<64x1xf32>
    %13 = arith.addf %11, %12 : vector<64x1xf32>
    %14 = math.rsqrt %13 : vector<64x1xf32>
    %15 = vector.broadcast %14 : vector<64x1xf32> to vector<64x147xf32>
    %16 = arith.mulf %6, %15 : vector<64x147xf32>
    %c0_5 = arith.constant 0 : index
    %c0_6 = arith.constant 0 : index
    %17 = vector.load %arg2[%c0_5, %c0_6] : memref<64x147xf32, #tpu.memory_space<vmem>>, vector<64x147xf32>
    tpu.vector_store %arg2[%c0_5, %c0_6], %16 {strides = array<i32>} : memref<64x147xf32, #tpu.memory_space<vmem>>, vector<64x147xf32>,
    return
  }
  func.func @transform_0(%arg0: i32) -> (i32, i32) {
    %c0_i32 = arith.constant 0 : i32
    %c0_i32_0 = arith.constant 0 : i32
    return %arg0, %c0_i32 : i32, i32
  }
  func.func @transform_1(%arg0: i32) -> (i32, i32) {
    %c0_i32 = arith.constant 0 : i32
    %c0_i32_0 = arith.constant 0 : i32
    return %arg0, %c0_i32 : i32, i32
  }
}

</mosaic_0001>

<llo_original>
// kernel: tpu_custom_call.1
$region0: #{tpu_custom_call.1}
  #allocation0 [shape = 'u32[]', space=smem, size = 0x4, offset = 0x4, fixed_abs, tag = 'smem constant byte address 0x4 - core index']
  #allocation1 [shape = 'u32[144,128]{1,0:T(1,128)}', space=vmem, size = 0x12000, scoped, tag = 'internal scratch']
  %s0 = inlined_call_operand.hbm [shape: f32[64,147], index: 0, kind: input, shape index: {}]
  %s1 = inlined_call_operand.hbm [shape: f32[64,147], index: 1, kind: output, shape index: {}]
  %s2 = sld [smem:[#allocation0]]
  $region18: #{tpu_custom_call.1} parent=0
    _
  %s4 = ssub.s32 1, %s2
  %s5 = scalar_select 0, %s4, %s2
  $region1: #{tpu_custom_call.1} parent=0
    #allocation2 [shape = 'u8[65536]{0}', space=vmem, size = 0x10000, scoped, tag = 'input window, operand 0, single buffered']
    #allocation3 [shape = 's32[1]{0}', space=sflag, size = 0x4, scoped, tag = 'scoped memory for tpu_custom_call.1']
    #allocation4 [shape = 's32[1]{0}', space=sflag, size = 0x4, scoped, tag = 'scoped memory for tpu_custom_call.1']
    #allocation5 [shape = 'u8[65536]{0}', space=vmem, size = 0x10000, scoped, tag = 'output window, operand 0, single buffered']
    %6 = vsyncpa [#allocation3], 0
    %7 = vsyncpa [#allocation4], 0
    // Predicated region
    $region2: #{tpu_custom_call.1} parent=1 // pred_check
      _
    $region3: #{tpu_custom_call.1} parent=1 // pred_check_branch
      %9 = sbr.rel (0) target = $region5
    $region4: #{tpu_custom_call.1} parent=1 // pred_region
      %s11 = ssub.s32 2048, 2048
      %12 = vsyncadd [#allocation3], %s11
      %s13 = sshll.u32 [#allocation2], 4
      %s14 = int_to_ptr.vmem [resolvable:$true] %s13
      %19 = dma.hbm_to_vmem [thread:$0]  %s0, 2048, %s14, [#allocation3], 256, 256, 16
    $region5: #{tpu_custom_call.1} parent=1 // pred_fallthru
      _
    // Predicated region
    $region6: #{tpu_custom_call.1} parent=1 // pred_check
      _
    $region7: #{tpu_custom_call.1} parent=1 // pred_check_branch
      %21 = sbr.rel (0) target = $region9
    $region8: #{tpu_custom_call.1} parent=1 // pred_region
      %22 = dma.done [#allocation3], 2048
    $region9: #{tpu_custom_call.1} parent=1 // pred_fallthru
      _
    %v23 = vld [vmem:[#allocation2] sm:$0xff]
    %v24 = vld [vmem:[#allocation2 + $0x8] sm:$0xff]
    %v25 = vld [vmem:[#allocation2 + $0x10] sm:$0xff]
    %v26 = vld [vmem:[#allocation2 + $0x18] sm:$0xff]
    %v27 = vld [vmem:[#allocation2 + $0x20] sm:$0xff]
    %v28 = vld [vmem:[#allocation2 + $0x28] sm:$0xff]
    %v29 = vld [vmem:[#allocation2 + $0x30] sm:$0xff]
    %v30 = vld [vmem:[#allocation2 + $0x38] sm:$0xff]
    %v31 = vld [vmem:[#allocation2 + $0x40] sm:$0xff]
    %v32 = vld [vmem:[#allocation2 + $0x48] sm:$0xff]
    %v33 = vld [vmem:[#allocation2 + $0x50] sm:$0xff]
    %v34 = vld [vmem:[#allocation2 + $0x58] sm:$0xff]
    %v35 = vld [vmem:[#allocation2 + $0x60] sm:$0xff]
    %v36 = vld [vmem:[#allocation2 + $0x68] sm:$0xff]
    %v37 = vld [vmem:[#allocation2 + $0x70] sm:$0xff]
    %v38 = vld [vmem:[#allocation2 + $0x78] sm:$0xff]
    %vm39 = vcmask 154624
    %v40 = vsel %vm39, %v24, 0.0
    %v41 = vadd.f32 %v23, %v40
    %42 = vadd.xlane.f32.xlu0 %v41
    %v43 = vpop.xlane.xlu0 %42
    %v44 = vsel %vm39, %v26, 0.0
    %v45 = vadd.f32 %v25, %v44
    %46 = vadd.xlane.f32.xlu0 %v45
    %v47 = vpop.xlane.xlu0 %46
    %v48 = vsel %vm39, %v28, 0.0
    %v49 = vadd.f32 %v27, %v48
    %50 = vadd.xlane.f32.xlu0 %v49
    %v51 = vpop.xlane.xlu0 %50
    %v52 = vsel %vm39, %v30, 0.0
    %v53 = vadd.f32 %v29, %v52
    %54 = vadd.xlane.f32.xlu0 %v53
    %v55 = vpop.xlane.xlu0 %54
    %v56 = vsel %vm39, %v32, 0.0
    %v57 = vadd.f32 %v31, %v56
    %58 = vadd.xlane.f32.xlu0 %v57
    %v59 = vpop.xlane.xlu0 %58
    %v60 = vsel %vm39, %v34, 0.0
    %v61 = vadd.f32 %v33, %v60
    %62 = vadd.xlane.f32.xlu0 %v61
    %v63 = vpop.xlane.xlu0 %62
    %v64 = vsel %vm39, %v36, 0.0
    %v65 = vadd.f32 %v35, %v64
    %66 = vadd.xlane.f32.xlu0 %v65
    %v67 = vpop.xlane.xlu0 %66
    %v68 = vsel %vm39, %v38, 0.0
    %v69 = vadd.f32 %v37, %v68
    %70 = vadd.xlane.f32.xlu0 %v69
    %v71 = vpop.xlane.xlu0 %70
    %v72 = vrcp.pop 147.0
    %v73 = vmul.f32 %v43, %v72
    %v74 = vmul.f32 %v47, %v72
    %v75 = vmul.f32 %v51, %v72
    %v76 = vmul.f32 %v55, %v72
    %v77 = vmul.f32 %v59, %v72
    %v78 = vmul.f32 %v63, %v72
    %v79 = vmul.f32 %v67, %v72
    %v80 = vmul.f32 %v71, %v72
    %v81 = vsub.f32 %v23, %v73
    %v82 = vsub.f32 %v24, %v73
    %v83 = vsub.f32 %v25, %v74
    %v84 = vsub.f32 %v26, %v74
    %v85 = vsub.f32 %v27, %v75
    %v86 = vsub.f32 %v28, %v75
    %v87 = vsub.f32 %v29, %v76
    %v88 = vsub.f32 %v30, %v76
    %v89 = vsub.f32 %v31, %v77
    %v90 = vsub.f32 %v32, %v77
    %v91 = vsub.f32 %v33, %v78
    %v92 = vsub.f32 %v34, %v78
    %v93 = vsub.f32 %v35, %v79
    %v94 = vsub.f32 %v36, %v79
    %v95 = vsub.f32 %v37, %v80
    %v96 = vsub.f32 %v38, %v80
    %v97 = vmul.f32 %v81, %v81
    %v98 = vmul.f32 %v82, %v82
    %v99 = vmul.f32 %v83, %v83
    %v100 = vmul.f32 %v84, %v84
    %v101 = vmul.f32 %v85, %v85
    %v102 = vmul.f32 %v86, %v86
    %v103 = vmul.f32 %v87, %v87
    %v104 = vmul.f32 %v88, %v88
    %v105 = vmul.f32 %v89, %v89
    %v106 = vmul.f32 %v90, %v90
    %v107 = vmul.f32 %v91, %v91
    %v108 = vmul.f32 %v92, %v92
    %v109 = vmul.f32 %v93, %v93
    %v110 = vmul.f32 %v94, %v94
    %v111 = vmul.f32 %v95, %v95
    %v112 = vmul.f32 %v96, %v96
    %v113 = vsel %vm39, %v98, 0.0
    %v114 = vadd.f32 %v97, %v113
    %115 = vadd.xlane.f32.xlu0 %v114
    %v116 = vpop.xlane.xlu0 %115
    %v117 = vsel %vm39, %v100, 0.0
    %v118 = vadd.f32 %v99, %v117
    %119 = vadd.xlane.f32.xlu0 %v118
    %v120 = vpop.xlane.xlu0 %119
    %v121 = vsel %vm39, %v102, 0.0
    %v122 = vadd.f32 %v101, %v121
    %123 = vadd.xlane.f32.xlu0 %v122
    %v124 = vpop.xlane.xlu0 %123
    %v125 = vsel %vm39, %v104, 0.0
    %v126 = vadd.f32 %v103, %v125
    %127 = vadd.xlane.f32.xlu0 %v126
    %v128 = vpop.xlane.xlu0 %127
    %v129 = vsel %vm39, %v106, 0.0
    %v130 = vadd.f32 %v105, %v129
    %131 = vadd.xlane.f32.xlu0 %v130
    %v132 = vpop.xlane.xlu0 %131
    %v133 = vsel %vm39, %v108, 0.0
    %v134 = vadd.f32 %v107, %v133
    %135 = vadd.xlane.f32.xlu0 %v134
    %v136 = vpop.xlane.xlu0 %135
    %v137 = vsel %vm39, %v110, 0.0
    %v138 = vadd.f32 %v109, %v137
    %139 = vadd.xlane.f32.xlu0 %v138
    %v140 = vpop.xlane.xlu0 %139
    %v141 = vsel %vm39, %v112, 0.0
    %v142 = vadd.f32 %v111, %v141
    %143 = vadd.xlane.f32.xlu0 %v142
    %v144 = vpop.xlane.xlu0 %143
    %v145 = vmul.f32 %v116, %v72
    %v146 = vmul.f32 %v120, %v72
    %v147 = vmul.f32 %v124, %v72
    %v148 = vmul.f32 %v128, %v72
    %v149 = vmul.f32 %v132, %v72
    %v150 = vmul.f32 %v136, %v72
    %v151 = vmul.f32 %v140, %v72
    %v152 = vmul.f32 %v144, %v72
    %v153 = vadd.f32 %v145, 1e-10
    %v154 = vadd.f32 %v146, 1e-10
    %v155 = vadd.f32 %v147, 1e-10
    %v156 = vadd.f32 %v148, 1e-10
    %v157 = vadd.f32 %v149, 1e-10
    %v158 = vadd.f32 %v150, 1e-10
    %v159 = vadd.f32 %v151, 1e-10
    %v160 = vadd.f32 %v152, 1e-10
    %v161 = vrsqrt.pop %v153
    %v162 = vrsqrt.pop %v154
    %v163 = vrsqrt.pop %v155
    %v164 = vrsqrt.pop %v156
    %v165 = vrsqrt.pop %v157
    %v166 = vrsqrt.pop %v158
    %v167 = vrsqrt.pop %v159
    %v168 = vrsqrt.pop %v160
    %v169 = vmul.f32 %v81, %v161
    %v170 = vmul.f32 %v82, %v161
    %v171 = vmul.f32 %v83, %v162
    %v172 = vmul.f32 %v84, %v162
    %v173 = vmul.f32 %v85, %v163
    %v174 = vmul.f32 %v86, %v163
    %v175 = vmul.f32 %v87, %v164
    %v176 = vmul.f32 %v88, %v164
    %v177 = vmul.f32 %v89, %v165
    %v178 = vmul.f32 %v90, %v165
    %v179 = vmul.f32 %v91, %v166
    %v180 = vmul.f32 %v92, %v166
    %v181 = vmul.f32 %v93, %v167
    %v182 = vmul.f32 %v94, %v167
    %v183 = vmul.f32 %v95, %v168
    %v184 = vmul.f32 %v96, %v168
    %185 = vst [vmem:[#allocation5] sm:$0xff] %v169
    %186 = vst.msk [vmem:[#allocation5 + $0x8] sm:$0xff] %vm39, %v170
    %187 = vst [vmem:[#allocation5 + $0x10] sm:$0xff] %v171
    %188 = vst.msk [vmem:[#allocation5 + $0x18] sm:$0xff] %vm39, %v172
    %189 = vst [vmem:[#allocation5 + $0x20] sm:$0xff] %v173
    %190 = vst.msk [vmem:[#allocation5 + $0x28] sm:$0xff] %vm39, %v174
    %191 = vst [vmem:[#allocation5 + $0x30] sm:$0xff] %v175
    %192 = vst.msk [vmem:[#allocation5 + $0x38] sm:$0xff] %vm39, %v176
    %193 = vst [vmem:[#allocation5 + $0x40] sm:$0xff] %v177
    %194 = vst.msk [vmem:[#allocation5 + $0x48] sm:$0xff] %vm39, %v178
    %195 = vst [vmem:[#allocation5 + $0x50] sm:$0xff] %v179
    %196 = vst.msk [vmem:[#allocation5 + $0x58] sm:$0xff] %vm39, %v180
    %197 = vst [vmem:[#allocation5 + $0x60] sm:$0xff] %v181
    %198 = vst.msk [vmem:[#allocation5 + $0x68] sm:$0xff] %vm39, %v182
    %199 = vst [vmem:[#allocation5 + $0x70] sm:$0xff] %v183
    %200 = vst.msk [vmem:[#allocation5 + $0x78] sm:$0xff] %vm39, %v184
    // Predicated region
    $region10: #{tpu_custom_call.1} parent=1 // pred_check
      _
    $region11: #{tpu_custom_call.1} parent=1 // pred_check_branch
      %202 = sbr.rel (0) target = $region13
    $region12: #{tpu_custom_call.1} parent=1 // pred_region
      %s204 = ssub.s32 2048, 2048
      %205 = vsyncadd [#allocation4], %s204
      %s206 = sshll.u32 [#allocation5], 4
      %s207 = int_to_ptr.vmem [resolvable:$true] %s206
      %212 = dma.vmem_to_hbm [thread:$0]  %s207, 2048, %s1, [#allocation4], 256, 256, 16
    $region13: #{tpu_custom_call.1} parent=1 // pred_fallthru
      _
    // Predicated region
    $region14: #{tpu_custom_call.1} parent=1 // pred_check
      _
    $region15: #{tpu_custom_call.1} parent=1 // pred_check_branch
      %214 = sbr.rel (0) target = $region17
    $region16: #{tpu_custom_call.1} parent=1 // pred_region
      %215 = dma.done [#allocation4], 2048
    $region17: #{tpu_custom_call.1} parent=1 // pred_fallthru
      _
    %216 = vsyncpa [#allocation3], 1
    %217 = vsyncpa [#allocation4], 1

</llo_original>
